<compile_context>
chip_gen: v7x
topology: tpu7x:2x2x1
jax: 0.10.0
libtpu: 0.0.40
codegen_flags: <defaults>
</compile_context>

<pallas_src>
import functools

import jax
import jax.numpy as jnp
from jax.experimental import pallas as pl
from jax.experimental.pallas import tpu as pltpu


def _round_up(v, m):
    return (v + m - 1) // m * m


def _pad2(a, rows, cols):
    r, c = a.shape
    return jnp.zeros((rows, cols), a.dtype).at[:r, :c].set(a)


def _silu(v):
    return v * jax.nn.sigmoid(v)


# ---------------------------------------------------------------------------
# Kernel: one batch tile per grid step, all weights resident in VMEM.
# ---------------------------------------------------------------------------
def _score_bridge_kernel(y_ref, x_ref, t_ref, tau_ref,
                         wa_ref, wt_ref, wh_ref, out_ref, *, dims):
    f32 = jnp.float32
    d = dims

    y = y_ref[...]            # [BT, DYI]   (d_y real cols, zero-padded)
    x = x_ref[...]            # [BT, DX]
    t = t_ref[...]            # [BT, 1] int32
    tau = tau_ref[...]        # [BT, 1] f32

    # --- time MLP layer 1: K=1 matmul is an outer product -> pure VPU -------
    wt1 = wt_ref[0:1, :]      # [1, E_pad]
    bt1 = wt_ref[1:2, :]      # [1, E_pad]
    tau_act = _silu(tau * wt1 + bt1)                       # [BT, E_pad]

    # --- trunk layer 1 (x_proj / t_embed / 2nd time-MLP linear folded in) ---
    h = jnp.dot(y, wa_ref[d["off_w1y"]:d["off_w1y"] + d["DYI"], :],
                preferred_element_type=f32)
    h += jnp.dot(x, wa_ref[d["off_w1x"]:d["off_w1x"] + d["DX"], :],
                 preferred_element_type=f32)
    h += jnp.dot(tau_act, wa_ref[d["off_w1tau"]:d["off_w1tau"] + d["E_pad"], :],
                 preferred_element_type=f32)
    # embedding lookup == select among k precomputed (folded) rows: VPU only.
    for c in range(d["k"]):
        sel = (t == c).astype(f32)                         # [BT, 1]
        h += sel * wa_ref[d["off_w1t"] + c:d["off_w1t"] + c + 1, :]
    h += wa_ref[d["off_b1"]:d["off_b1"] + 1, :]
    h = _silu(h)                                           # [BT, H_pad]

    # --- trunk layer 2 -------------------------------------------------------
    h = jnp.dot(h, wa_ref[d["off_w2"]:d["off_w2"] + d["H_pad"], :],
                preferred_element_type=f32)
    h += wa_ref[d["off_b2"]:d["off_b2"] + 1, :]
    h = _silu(h)

    # --- score head (lane-dense [BT, DY_pad] store) --------------------------
    out = jnp.dot(h, wh_ref[0:d["H_pad"], :], preferred_element_type=f32)
    out_ref[...] = out + wh_ref[d["H_pad"]:d["H_pad"] + 1, :]


# ---------------------------------------------------------------------------
# Host-side: parameter init, folding + slab packing, forward wrapper.
# ---------------------------------------------------------------------------
def init_params(key, d_x, d_y, k, hidden, embed_dim):
    """Deterministic synthetic parameters (shapes follow ScoreBridge.__init__)."""
    ks = jax.random.split(key, 16)

    def lin(kw, kb, fan_in, fan_out):
        w = jax.random.normal(kw, (fan_in, fan_out), jnp.float32) / jnp.sqrt(
            jnp.float32(fan_in))
        b = 0.01 * jax.random.normal(kb, (1, fan_out), jnp.float32)
        return w, b

    params = {}
    params["t_embed"] = jax.random.normal(ks[0], (k, embed_dim), jnp.float32)
    params["wt1"], params["bt1"] = lin(ks[1], ks[2], 1, embed_dim)
    params["wt2"], params["bt2"] = lin(ks[3], ks[4], embed_dim, embed_dim)
    params["wx"],  params["bx"]  = lin(ks[5], ks[6], d_x, embed_dim)
    params["w1"],  params["b1"]  = lin(ks[7], ks[8], embed_dim * 3 + d_y, hidden)
    params["w2"],  params["b2"]  = lin(ks[9], ks[10], hidden, hidden)
    params["w3"],  params["b3"]  = lin(ks[11], ks[12], hidden, d_y)
    return params


def fold_and_pack_params(params, d_x, d_y, k, hidden, embed_dim):
    """Fold linear-only branches into trunk layer 1 and pack into 3 slabs.

    Call once per parameter version; reuse the result across forward calls.
    """
    f32 = jnp.float32
    e = embed_dim
    hdot = functools.partial(jnp.dot, precision=jax.lax.Precision.HIGHEST)

    E_pad = _round_up(e, 128)
    H_pad = _round_up(hidden, 128)
    DY_pad = _round_up(d_y, 128)
    DYI = _round_up(d_y, 8)
    DX = _round_up(d_x, 8)
    KP = _round_up(k, 8)

    w1 = params["w1"]
    w1y = w1[:d_y]
    w1x = w1[d_y:d_y + e]
    w1t = w1[d_y + e:d_y + 2 * e]
    w1tau = w1[d_y + 2 * e:]

    # Exact algebraic folds (linear composition; only the time-MLP SiLU remains).
    w1x_f = hdot(params["wx"], w1x)                       # [d_x, hidden]
    w1t_f = hdot(params["t_embed"], w1t)                  # [k, hidden]
    w1tau_f = hdot(params["wt2"], w1tau)                  # [e, hidden]
    b1_f = (params["b1"] + hdot(params["bx"], w1x)
            + hdot(params["bt2"], w1tau))                 # [1, hidden]

    # Slab A (lane width H_pad): trunk layer-1 partials + biases + trunk layer-2.
    segs = [(w1y, DYI), (w1x_f, DX), (w1t_f, KP), (w1tau_f, E_pad),
            (b1_f, 8), (params["w2"], H_pad), (params["b2"], 8)]
    offs, blocks, rows = [], [], 0
    for a, rpad in segs:
        offs.append(rows)
        blocks.append(_pad2(a.astype(f32), rpad, H_pad))
        rows += rpad
    slab_a = jnp.concatenate(blocks, axis=0)

    # Slab T: time-MLP first layer (row 0 = wt1, row 1 = bt1), lane width E_pad.
    slab_t = jnp.zeros((8, E_pad), f32)
    slab_t = slab_t.at[0, :e].set(params["wt1"][0])
    slab_t = slab_t.at[1, :e].set(params["bt1"][0])

    # Slab H: score head [w3 ; b3], lane width DY_pad (output stays lane-dense).
    slab_h = jnp.concatenate(
        [_pad2(params["w3"].astype(f32), H_pad, DY_pad),
         _pad2(params["b3"].astype(f32), 8, DY_pad)], axis=0)

    dims = dict(d_y=d_y, k=k,
                DYI=DYI, DX=DX, KP=KP, E_pad=E_pad, H_pad=H_pad, DY_pad=DY_pad,
                off_w1y=offs[0], off_w1x=offs[1], off_w1t=offs[2],
                off_w1tau=offs[3], off_b1=offs[4], off_w2=offs[5], off_b2=offs[6])
    return dict(slab_a=slab_a, slab_t=slab_t, slab_h=slab_h, dims=dims)


def score_bridge_forward(packed, y_noisy, x, t, tau):
    """Pallas-backed forward.  y_noisy:[B,d_y]  x:[B,d_x]  t:[B] int  tau:[B,1]."""
    d = packed["dims"]
    f32 = jnp.float32
    B = y_noisy.shape[0]

    # Batch tiling: >=128-row blocks once the batch is large enough; weights
    # stay resident (constant index_map) so only batch slices stream per step.
    BT = 128 if B >= 128 else _round_up(B, 8)
    n_blk = pl.cdiv(B, BT)
    B_pad = n_blk * BT

    y_p = _pad2(y_noisy.astype(f32), B_pad, d["DYI"])
    x_p = _pad2(x.astype(f32), B_pad, d["DX"])
    t_p = jnp.zeros((B_pad, 1), jnp.int32).at[:B, 0].set(t.astype(jnp.int32))
    tau_p = _pad2(tau.astype(f32), B_pad, 1)

    slab_a = packed["slab_a"]
    slab_t = packed["slab_t"]
    slab_h = packed["slab_h"]

    H, E, DYo = d["H_pad"], d["E_pad"], d["DY_pad"]
    flops = 2 * B_pad * H * (d["DYI"] + d["DX"] + E + H) + 2 * B_pad * H * DYo
    transcendentals = B_pad * (E + 2 * H)
    bytes_accessed = 4 * (y_p.size + x_p.size + t_p.size + tau_p.size
                          + slab_a.size + slab_t.size + slab_h.size
                          + B_pad * DYo)

    kernel = functools.partial(_score_bridge_kernel, dims=d)

    out_pad = pl.pallas_call(
        kernel,
        out_shape=jax.ShapeDtypeStruct((B_pad, DYo), f32),
        grid=(n_blk,),
        in_specs=[
            pl.BlockSpec((BT, d["DYI"]), lambda i: (i, 0)),
            pl.BlockSpec((BT, d["DX"]),  lambda i: (i, 0)),
            pl.BlockSpec((BT, 1),        lambda i: (i, 0)),
            pl.BlockSpec((BT, 1),        lambda i: (i, 0)),
            pl.BlockSpec(slab_a.shape,   lambda i: (0, 0)),
            pl.BlockSpec(slab_t.shape,   lambda i: (0, 0)),
            pl.BlockSpec(slab_h.shape,   lambda i: (0, 0)),
        ],
        out_specs=pl.BlockSpec((BT, DYo), lambda i: (i, 0)),
        compiler_params=pltpu.CompilerParams(
            dimension_semantics=("parallel",)),
        cost_estimate=pl.CostEstimate(
            flops=int(flops),
            transcendentals=int(transcendentals),
            bytes_accessed=int(bytes_accessed)),
    )(y_p, x_p, t_p, tau_p, slab_a, slab_t, slab_h)

    return out_pad[:B, :d["d_y"]]


def score_bridge_reference(params, y_noisy, x, t, tau):
    """Pure-JAX reference mirroring the PyTorch forward exactly."""
    t_emb = params["t_embed"][t]
    th = _silu(tau @ params["wt1"] + params["bt1"])
    tau_emb = th @ params["wt2"] + params["bt2"]
    x_emb = x @ params["wx"] + params["bx"]
    h = jnp.concatenate([y_noisy, x_emb, t_emb, tau_emb], axis=-1)
    h = _silu(h @ params["w1"] + params["b1"])
    h = _silu(h @ params["w2"] + params["b2"])
    return h @ params["w3"] + params["b3"]


if __name__ == "__main__":
    B, d_x, d_y, k, hidden, embed_dim = 8, 16, 4, 3, 32, 16

    key = jax.random.PRNGKey(0)
    k_param, k_y, k_x, k_t, k_tau = jax.random.split(key, 5)

    params = init_params(k_param, d_x, d_y, k, hidden, embed_dim)
    y_noisy = jax.random.normal(k_y, (B, d_y), jnp.float32)
    x = jax.random.normal(k_x, (B, d_x), jnp.float32)
    t = jax.random.randint(k_t, (B,), 0, k)
    tau = jax.random.uniform(k_tau, (B, 1), jnp.float32)

    packed = fold_and_pack_params(params, d_x, d_y, k, hidden, embed_dim)

    out = score_bridge_forward(packed, y_noisy, x, t, tau)
    out = jax.block_until_ready(out)

    ref = score_bridge_reference(params, y_noisy, x, t, tau)
    assert out.shape == (B, d_y)
    assert jnp.allclose(out, ref, atol=1e-4, rtol=1e-4), "mismatch vs JAX reference"

    print("KERNEL_OK")
</pallas_src>

<mosaic_0001>
module attributes {stable_mosaic.version = 11 : i64} {
  func.func @_score_bridge_kernel(%arg0: i32, %arg1: memref<8x8xf32, #tpu.memory_space<vmem>>, %arg2: memref<8x16xf32, #tpu.memory_space<vmem>>, %arg3: memref<8x1xi32, #tpu.memory_space<vmem>>, %arg4: memref<8x1xf32, #tpu.memory_space<vmem>>, %arg5: memref<304x128xf32, #tpu.memory_space<vmem>>, %arg6: memref<8x128xf32, #tpu.memory_space<vmem>>, %arg7: memref<136x128xf32, #tpu.memory_space<vmem>>, %arg8: memref<8x128xf32, #tpu.memory_space<vmem>>) attributes {dimension_semantics = [#tpu.dimension_semantics<parallel>], iteration_bounds = array<i64: 1>, scalar_prefetch = 0 : i64, scratch_operands = 0 : i64, tpu.core_type = #tpu.core_type<tc>, window_params = [{transform_indices = @transform_0, window_bounds = array<i64: 8, 8>}, {transform_indices = @transform_1, window_bounds = array<i64: 8, 16>}, {transform_indices = @transform_2, window_bounds = array<i64: 8, 1>}, {transform_indices = @transform_3, window_bounds = array<i64: 8, 1>}, {pipeline_mode = #tpu.pipeline_mode<synchronous>, transform_indices = @transform_4, window_bounds = array<i64: 304, 128>}, {pipeline_mode = #tpu.pipeline_mode<synchronous>, transform_indices = @transform_5, window_bounds = array<i64: 8, 128>}, {pipeline_mode = #tpu.pipeline_mode<synchronous>, transform_indices = @transform_6, window_bounds = array<i64: 136, 128>}, {transform_indices = @transform_7, window_bounds = array<i64: 8, 128>}]} {
    %c0 = arith.constant 0 : index
    %c0_0 = arith.constant 0 : index
    %0 = vector.load %arg1[%c0, %c0_0] : memref<8x8xf32, #tpu.memory_space<vmem>>, vector<8x8xf32>
    %c0_1 = arith.constant 0 : index
    %c0_2 = arith.constant 0 : index
    %1 = vector.load %arg2[%c0_1, %c0_2] : memref<8x16xf32, #tpu.memory_space<vmem>>, vector<8x16xf32>
    %c0_3 = arith.constant 0 : index
    %c0_4 = arith.constant 0 : index
    %2 = vector.load %arg3[%c0_3, %c0_4] : memref<8x1xi32, #tpu.memory_space<vmem>>, vector<8x1xi32>
    %c0_5 = arith.constant 0 : index
    %c0_6 = arith.constant 0 : index
    %3 = vector.load %arg4[%c0_5, %c0_6] : memref<8x1xf32, #tpu.memory_space<vmem>>, vector<8x1xf32>
    %c0_7 = arith.constant 0 : index
    %c0_8 = arith.constant 0 : index
    %4 = vector.load %arg6[%c0_7, %c0_8] : memref<8x128xf32, #tpu.memory_space<vmem>>, vector<1x128xf32>
    %c1 = arith.constant 1 : index
    %c0_9 = arith.constant 0 : index
    %5 = vector.load %arg6[%c1, %c0_9] : memref<8x128xf32, #tpu.memory_space<vmem>>, vector<1x128xf32>
    %6 = vector.broadcast %3 : vector<8x1xf32> to vector<8x128xf32>
    %7 = vector.broadcast %4 : vector<1x128xf32> to vector<8x128xf32>
    %8 = arith.mulf %6, %7 : vector<8x128xf32>
    %9 = vector.broadcast %5 : vector<1x128xf32> to vector<8x128xf32>
    %10 = arith.addf %8, %9 : vector<8x128xf32>
    %11 = arith.negf %10 : vector<8x128xf32>
    %12 = math.exp %11 : vector<8x128xf32>
    %cst = arith.constant 1.000000e+00 : f32
    %13 = vector.broadcast %cst : f32 to vector<8x128xf32>
    %14 = arith.addf %13, %12 : vector<8x128xf32>
    %15 = arith.divf %13, %14 : vector<8x128xf32>
    %16 = arith.mulf %10, %15 : vector<8x128xf32>
    %c0_10 = arith.constant 0 : index
    %c0_11 = arith.constant 0 : index
    %17 = vector.load %arg5[%c0_10, %c0_11] : memref<304x128xf32, #tpu.memory_space<vmem>>, vector<8x128xf32>
    %cst_12 = arith.constant dense<0.000000e+00> : vector<8x128xf32>
    %18 = tpu.matmul %0, %17, %cst_12 {dimension_numbers = #tpu.dot_dimension_numbers<[1], [0], [0], [1], [0, 0, 1, 1], [], []>} : vector<8x8xf32>, vector<8x128xf32>, vector<8x128xf32> -> vector<8x128xf32>
    %c8 = arith.constant 8 : index
    %c0_13 = arith.constant 0 : index
    %19 = vector.load %arg5[%c8, %c0_13] : memref<304x128xf32, #tpu.memory_space<vmem>>, vector<16x128xf32>
    %cst_14 = arith.constant dense<0.000000e+00> : vector<8x128xf32>
    %20 = tpu.matmul %1, %19, %cst_14 {dimension_numbers = #tpu.dot_dimension_numbers<[1], [0], [0], [1], [0, 0, 1, 1], [], []>} : vector<8x16xf32>, vector<16x128xf32>, vector<8x128xf32> -> vector<8x128xf32>
    %21 = arith.addf %18, %20 : vector<8x128xf32>
    %c32 = arith.constant 32 : index
    %c0_15 = arith.constant 0 : index
    %22 = vector.load %arg5[%c32, %c0_15] : memref<304x128xf32, #tpu.memory_space<vmem>>, vector<128x128xf32>
    %cst_16 = arith.constant dense<0.000000e+00> : vector<8x128xf32>
    %23 = tpu.matmul %16, %22, %cst_16 {dimension_numbers = #tpu.dot_dimension_numbers<[1], [0], [0], [1], [0, 0, 1, 1], [], []>} : vector<8x128xf32>, vector<128x128xf32>, vector<8x128xf32> -> vector<8x128xf32>
    %24 = arith.addf %21, %23 : vector<8x128xf32>
    %c0_i32 = arith.constant 0 : i32
    %25 = vector.broadcast %c0_i32 : i32 to vector<8x1xi32>
    %26 = arith.cmpi eq, %2, %25 : vector<8x1xi32>
    %27 = arith.extui %26 : vector<8x1xi1> to vector<8x1xi32>
    %28 = arith.sitofp %27 : vector<8x1xi32> to vector<8x1xf32>
    %c24 = arith.constant 24 : index
    %c0_17 = arith.constant 0 : index
    %29 = vector.load %arg5[%c24, %c0_17] : memref<304x128xf32, #tpu.memory_space<vmem>>, vector<1x128xf32>
    %30 = vector.broadcast %28 : vector<8x1xf32> to vector<8x128xf32>
    %31 = vector.broadcast %29 : vector<1x128xf32> to vector<8x128xf32>
    %32 = arith.mulf %30, %31 : vector<8x128xf32>
    %33 = arith.addf %24, %32 : vector<8x128xf32>
    %c1_i32 = arith.constant 1 : i32
    %34 = vector.broadcast %c1_i32 : i32 to vector<8x1xi32>
    %35 = arith.cmpi eq, %2, %34 : vector<8x1xi32>
    %36 = arith.extui %35 : vector<8x1xi1> to vector<8x1xi32>
    %37 = arith.sitofp %36 : vector<8x1xi32> to vector<8x1xf32>
    %c25 = arith.constant 25 : index
    %c0_18 = arith.constant 0 : index
    %38 = vector.load %arg5[%c25, %c0_18] : memref<304x128xf32, #tpu.memory_space<vmem>>, vector<1x128xf32>
    %39 = vector.broadcast %37 : vector<8x1xf32> to vector<8x128xf32>
    %40 = vector.broadcast %38 : vector<1x128xf32> to vector<8x128xf32>
    %41 = arith.mulf %39, %40 : vector<8x128xf32>
    %42 = arith.addf %33, %41 : vector<8x128xf32>
    %c2_i32 = arith.constant 2 : i32
    %43 = vector.broadcast %c2_i32 : i32 to vector<8x1xi32>
    %44 = arith.cmpi eq, %2, %43 : vector<8x1xi32>
    %45 = arith.extui %44 : vector<8x1xi1> to vector<8x1xi32>
    %46 = arith.sitofp %45 : vector<8x1xi32> to vector<8x1xf32>
    %c26 = arith.constant 26 : index
    %c0_19 = arith.constant 0 : index
    %47 = vector.load %arg5[%c26, %c0_19] : memref<304x128xf32, #tpu.memory_space<vmem>>, vector<1x128xf32>
    %48 = vector.broadcast %46 : vector<8x1xf32> to vector<8x128xf32>
    %49 = vector.broadcast %47 : vector<1x128xf32> to vector<8x128xf32>
    %50 = arith.mulf %48, %49 : vector<8x128xf32>
    %51 = arith.addf %42, %50 : vector<8x128xf32>
    %c160 = arith.constant 160 : index
    %c0_20 = arith.constant 0 : index
    %52 = vector.load %arg5[%c160, %c0_20] : memref<304x128xf32, #tpu.memory_space<vmem>>, vector<1x128xf32>
    %53 = vector.broadcast %52 : vector<1x128xf32> to vector<8x128xf32>
    %54 = arith.addf %51, %53 : vector<8x128xf32>
    %55 = arith.negf %54 : vector<8x128xf32>
    %56 = math.exp %55 : vector<8x128xf32>
    %cst_21 = arith.constant 1.000000e+00 : f32
    %57 = vector.broadcast %cst_21 : f32 to vector<8x128xf32>
    %58 = arith.addf %57, %56 : vector<8x128xf32>
    %59 = arith.divf %57, %58 : vector<8x128xf32>
    %60 = arith.mulf %54, %59 : vector<8x128xf32>
    %c168 = arith.constant 168 : index
    %c0_22 = arith.constant 0 : index
    %61 = vector.load %arg5[%c168, %c0_22] : memref<304x128xf32, #tpu.memory_space<vmem>>, vector<128x128xf32>
    %cst_23 = arith.constant dense<0.000000e+00> : vector<8x128xf32>
    %62 = tpu.matmul %60, %61, %cst_23 {dimension_numbers = #tpu.dot_dimension_numbers<[1], [0], [0], [1], [0, 0, 1, 1], [], []>} : vector<8x128xf32>, vector<128x128xf32>, vector<8x128xf32> -> vector<8x128xf32>
    %c296 = arith.constant 296 : index
    %c0_24 = arith.constant 0 : index
    %63 = vector.load %arg5[%c296, %c0_24] : memref<304x128xf32, #tpu.memory_space<vmem>>, vector<1x128xf32>
    %64 = vector.broadcast %63 : vector<1x128xf32> to vector<8x128xf32>
    %65 = arith.addf %62, %64 : vector<8x128xf32>
    %66 = arith.negf %65 : vector<8x128xf32>
    %67 = math.exp %66 : vector<8x128xf32>
    %cst_25 = arith.constant 1.000000e+00 : f32
    %68 = vector.broadcast %cst_25 : f32 to vector<8x128xf32>
    %69 = arith.addf %68, %67 : vector<8x128xf32>
    %70 = arith.divf %68, %69 : vector<8x128xf32>
    %71 = arith.mulf %65, %70 : vector<8x128xf32>
    %c0_26 = arith.constant 0 : index
    %c0_27 = arith.constant 0 : index
    %72 = vector.load %arg7[%c0_26, %c0_27] : memref<136x128xf32, #tpu.memory_space<vmem>>, vector<128x128xf32>
    %cst_28 = arith.constant dense<0.000000e+00> : vector<8x128xf32>
    %73 = tpu.matmul %71, %72, %cst_28 {dimension_numbers = #tpu.dot_dimension_numbers<[1], [0], [0], [1], [0, 0, 1, 1], [], []>} : vector<8x128xf32>, vector<128x128xf32>, vector<8x128xf32> -> vector<8x128xf32>
    %c128 = arith.constant 128 : index
    %c0_29 = arith.constant 0 : index
    %74 = vector.load %arg7[%c128, %c0_29] : memref<136x128xf32, #tpu.memory_space<vmem>>, vector<1x128xf32>
    %75 = vector.broadcast %74 : vector<1x128xf32> to vector<8x128xf32>
    %76 = arith.addf %73, %75 : vector<8x128xf32>
    %c0_30 = arith.constant 0 : index
    %c0_31 = arith.constant 0 : index
    %77 = vector.load %arg8[%c0_30, %c0_31] : memref<8x128xf32, #tpu.memory_space<vmem>>, vector<8x128xf32>
    tpu.vector_store %arg8[%c0_30, %c0_31], %76 {strides = array<i32>} : memref<8x128xf32, #tpu.memory_space<vmem>>, vector<8x128xf32>,
    return
  }
  func.func @transform_0(%arg0: i32) -> (i32, i32) {
    %c0_i32 = arith.constant 0 : i32
    %c0_i32_0 = arith.constant 0 : i32
    return %arg0, %c0_i32 : i32, i32
  }
  func.func @transform_1(%arg0: i32) -> (i32, i32) {
    %c0_i32 = arith.constant 0 : i32
    %c0_i32_0 = arith.constant 0 : i32
    return %arg0, %c0_i32 : i32, i32
  }
  func.func @transform_2(%arg0: i32) -> (i32, i32) {
    %c0_i32 = arith.constant 0 : i32
    %c0_i32_0 = arith.constant 0 : i32
    return %arg0, %c0_i32 : i32, i32
  }
  func.func @transform_3(%arg0: i32) -> (i32, i32) {
    %c0_i32 = arith.constant 0 : i32
    %c0_i32_0 = arith.constant 0 : i32
    return %arg0, %c0_i32 : i32, i32
  }
  func.func @transform_4(%arg0: i32) -> (i32, i32) {
    %c0_i32 = arith.constant 0 : i32
    %c0_i32_0 = arith.constant 0 : i32
    %c0_i32_1 = arith.constant 0 : i32
    return %c0_i32, %c0_i32_0 : i32, i32
  }
  func.func @transform_5(%arg0: i32) -> (i32, i32) {
    %c0_i32 = arith.constant 0 : i32
    %c0_i32_0 = arith.constant 0 : i32
    %c0_i32_1 = arith.constant 0 : i32
    return %c0_i32, %c0_i32_0 : i32, i32
  }
  func.func @transform_6(%arg0: i32) -> (i32, i32) {
    %c0_i32 = arith.constant 0 : i32
    %c0_i32_0 = arith.constant 0 : i32
    %c0_i32_1 = arith.constant 0 : i32
    return %c0_i32, %c0_i32_0 : i32, i32
  }
  func.func @transform_7(%arg0: i32) -> (i32, i32) {
    %c0_i32 = arith.constant 0 : i32
    %c0_i32_0 = arith.constant 0 : i32
    return %arg0, %c0_i32 : i32, i32
  }
}

</mosaic_0001>

<llo_original>
// kernel: tpu_custom_call.1
$region0: #{tpu_custom_call.1}
  #allocation0 [shape = 'u32[]', space=smem, size = 0x4, offset = 0x4, fixed_abs, tag = 'smem constant byte address 0x4 - core index']
  #allocation1 [shape = 'u32[144,128]{1,0:T(1,128)}', space=vmem, size = 0x12000, scoped, tag = 'internal scratch']
  %s0 = inlined_call_operand.vmem [shape: f32[8,8], index: 0, kind: input, shape index: {}]
  %s1 = inlined_call_operand.vmem [shape: f32[8,16], index: 1, kind: input, shape index: {}]
  %s2 = inlined_call_operand.vmem [shape: s32[8,1], index: 2, kind: input, shape index: {}]
  %s3 = inlined_call_operand.vmem [shape: f32[8,1], index: 3, kind: input, shape index: {}]
  %s4 = inlined_call_operand.hbm [shape: f32[304,128], index: 4, kind: input, shape index: {}]
  %s5 = inlined_call_operand.vmem [shape: f32[8,128], index: 5, kind: input, shape index: {}]
  %s6 = inlined_call_operand.hbm [shape: f32[136,128], index: 6, kind: input, shape index: {}]
  %s7 = inlined_call_operand.hbm [shape: f32[8,128], index: 7, kind: output, shape index: {}]
  %s8 = sld [smem:[#allocation0]]
  $region46: #{tpu_custom_call.1} parent=0
    _
  %s10 = ssub.s32 1, %s8
  %s11 = scalar_select 0, %s10, %s8
  $region1: #{tpu_custom_call.1} parent=0
    #allocation2 [shape = 'u8[155648]{0}', space=vmem, size = 0x26000, scoped, tag = 'input window, operand 4, single buffered']
    #allocation3 [shape = 's32[1]{0}', space=sflag, size = 0x4, scoped, tag = 'scoped memory for tpu_custom_call.1']
    #allocation4 [shape = 's32[1]{0}', space=sflag, size = 0x4, scoped, tag = 'scoped memory for tpu_custom_call.1']
    #allocation5 [shape = 'u8[69632]{0}', space=vmem, size = 0x11000, scoped, tag = 'input window, operand 6, single buffered']
    #allocation6 [shape = 's32[1]{0}', space=sflag, size = 0x4, scoped, tag = 'scoped memory for tpu_custom_call.1']
    #allocation7 [shape = 'u8[4096]{0}', space=vmem, size = 0x1000, scoped, tag = 'output window, operand 0, single buffered']
    %12 = vsyncpa [#allocation3], 0
    %13 = vsyncpa [#allocation6], 0
    %14 = vsyncpa [#allocation4], 0
    // Predicated region
    $region2: #{tpu_custom_call.1} parent=1 // pred_check
      _
    $region3: #{tpu_custom_call.1} parent=1 // pred_check_branch
      %16 = sbr.rel (0) target = $region5
    $region4: #{tpu_custom_call.1} parent=1 // pred_region
      _
    $region5: #{tpu_custom_call.1} parent=1 // pred_fallthru
      _
    // Predicated region
    $region6: #{tpu_custom_call.1} parent=1 // pred_check
      _
    $region7: #{tpu_custom_call.1} parent=1 // pred_check_branch
      %18 = sbr.rel (0) target = $region9
    $region8: #{tpu_custom_call.1} parent=1 // pred_region
      _
    $region9: #{tpu_custom_call.1} parent=1 // pred_fallthru
      _
    // Predicated region
    $region10: #{tpu_custom_call.1} parent=1 // pred_check
      _
    $region11: #{tpu_custom_call.1} parent=1 // pred_check_branch
      %20 = sbr.rel (0) target = $region13
    $region12: #{tpu_custom_call.1} parent=1 // pred_region
      _
    $region13: #{tpu_custom_call.1} parent=1 // pred_fallthru
      _
    // Predicated region
    $region14: #{tpu_custom_call.1} parent=1 // pred_check
      _
    $region15: #{tpu_custom_call.1} parent=1 // pred_check_branch
      %22 = sbr.rel (0) target = $region17
    $region16: #{tpu_custom_call.1} parent=1 // pred_region
      _
    $region17: #{tpu_custom_call.1} parent=1 // pred_fallthru
      _
    // Predicated region
    $region18: #{tpu_custom_call.1} parent=1 // pred_check
      _
    $region19: #{tpu_custom_call.1} parent=1 // pred_check_branch
      %24 = sbr.rel (0) target = $region21
    $region20: #{tpu_custom_call.1} parent=1 // pred_region
      %s26 = ssub.s32 4864, 4864
      %27 = vsyncadd [#allocation3], %s26
      %s28 = sshll.u32 [#allocation2], 4
      %s29 = int_to_ptr.vmem [resolvable:$true] %s28
      %34 = dma.hbm_to_vmem [thread:$0]  %s4, 4864, %s29, [#allocation3], 128, 128, 8
    $region21: #{tpu_custom_call.1} parent=1 // pred_fallthru
      _
    // Predicated region
    $region22: #{tpu_custom_call.1} parent=1 // pred_check
      _
    $region23: #{tpu_custom_call.1} parent=1 // pred_check_branch
      %36 = sbr.rel (0) target = $region25
    $region24: #{tpu_custom_call.1} parent=1 // pred_region
      _
    $region25: #{tpu_custom_call.1} parent=1 // pred_fallthru
      _
    // Predicated region
    $region26: #{tpu_custom_call.1} parent=1 // pred_check
      _
    $region27: #{tpu_custom_call.1} parent=1 // pred_check_branch
      %38 = sbr.rel (0) target = $region29
    $region28: #{tpu_custom_call.1} parent=1 // pred_region
      %s40 = ssub.s32 2176, 2176
      %41 = vsyncadd [#allocation6], %s40
      %s42 = sshll.u32 [#allocation5], 4
      %s43 = int_to_ptr.vmem [resolvable:$true] %s42
      %48 = dma.hbm_to_vmem [thread:$0]  %s6, 2176, %s43, [#allocation6], 128, 128, 8
    $region29: #{tpu_custom_call.1} parent=1 // pred_fallthru
      _
    // Predicated region
    $region30: #{tpu_custom_call.1} parent=1 // pred_check
      _
    $region31: #{tpu_custom_call.1} parent=1 // pred_check_branch
      %50 = sbr.rel (0) target = $region33
    $region32: #{tpu_custom_call.1} parent=1 // pred_region
      %51 = dma.done [#allocation3], 4864
    $region33: #{tpu_custom_call.1} parent=1 // pred_fallthru
      _
    // Predicated region
    $region34: #{tpu_custom_call.1} parent=1 // pred_check
      _
    $region35: #{tpu_custom_call.1} parent=1 // pred_check_branch
      %53 = sbr.rel (0) target = $region37
    $region36: #{tpu_custom_call.1} parent=1 // pred_region
      %54 = dma.done [#allocation6], 2176
    $region37: #{tpu_custom_call.1} parent=1 // pred_fallthru
      _
    %v55 = vld [vmem:[%s0] sm:$0xff]
    %v56 = vld [vmem:[%s1] sm:$0xff]
    %v57 = vld [vmem:[%s2] sm:$0xff]
    %v58 = vld [vmem:[%s3] sm:$0xff]
    %v59 = vld [vmem:[%s5] sm:$0x1]
    %v60 = vld [vmem:[%s5 + $0x1] sm:$0x1]
    %62 = vset.pattern.permute.xlu0 0
    %63 = vperm.xlu0 %62, %v58
    %v64 = vpop.permute.xlu0 %63
    %v66 = vlaneseq
    %v67 = vshrl.u32 %v66, 7
    %v68 = vsub.s32 0, %v67
    %v69 = vrot.slane %v59, %v68
    %v70 = vmul.f32 %v64, %v69
    %v71 = vlaneseq
    %v72 = vshrl.u32 %v71, 7
    %v73 = vsub.s32 0, %v72
    %v74 = vrot.slane %v60, %v73
    %v75 = vadd.f32 %v70, %v74
    %v76 = vxor.u32 %v75, 2147483648
    %v77 = vmul.f32 %v76, 1.442695
    %v78 = vpow.pop %v77
    %v79 = vadd.f32 %v78, 1.0
    %v80 = vrcp.pop %v79
    %v81 = vmul.f32 1.0, %v80
    %v82 = vmul.f32 %v75, %v81
    %v83 = vld [vmem:[#allocation2] sm:$0xff]
    %v84 = vld [vmem:[#allocation2 + $0x8] sm:$0xff]
    %v85 = vld [vmem:[#allocation2 + $0x10] sm:$0xff]
    %vm86 = vcmask 130048
    %v88 = vsel %vm86, %v56, 0
    %90 = vmatprep.subr.mxu0 0.0
    %91 = vmatpush1.msra.mxu0 %v84
    %92 = vmatprep.subr.mxu0 0.0
    %93 = vmatpush1.msra.mxu0 %v85
    %94 = vmatprep.subr.mxu0 0.0
    %95 = vmatpush1.msra.mxu0 0.0
    %96 = vmatprep.subr.mxu0 0.0
    %97 = vmatpush1.msra.mxu0 0.0
    %98 = vmatprep.subr.mxu0 0.0
    %99 = vmatpush1.msra.mxu0 0.0
    %100 = vmatprep.subr.mxu0 0.0
    %101 = vmatpush1.msra.mxu0 0.0
    %102 = vmatprep.subr.mxu0 0.0
    %103 = vmatpush1.msra.mxu0 0.0
    %104 = vmatprep.subr.mxu0 0.0
    %105 = vmatpush1.msra.mxu0 0.0
    %106 = vmatprep.subr.mxu0 0.0
    %107 = vmatpush1.msra.mxu0 0.0
    %108 = vmatprep.subr.mxu0 0.0
    %109 = vmatpush1.msra.mxu0 0.0
    %110 = vmatprep.subr.mxu0 0.0
    %111 = vmatpush1.msra.mxu0 0.0
    %112 = vmatprep.subr.mxu0 0.0
    %113 = vmatpush1.msra.mxu0 0.0
    %114 = vmatprep.subr.mxu0 0.0
    %115 = vmatpush1.msra.mxu0 0.0
    %116 = vmatprep.subr.mxu0 0.0
    %117 = vmatpush1.msra.mxu0 0.0
    %118 = vmatprep.subr.mxu0 0.0
    %119 = vmatpush1.msra.mxu0 0.0
    %120 = vmatprep.subr.mxu0 0.0
    %121 = vmatpush1.msra.mxu0 0.0
    %122 = vmatprep.subr.mxu0 0.0
    %123 = vmatpush1.msra.mxu0 0.0
    %124 = vmatprep.subr.mxu0 0.0
    %125 = vmatpush1.msra.mxu0 0.0
    %126 = vmatprep.subr.mxu0 0.0
    %127 = vmatpush1.msra.mxu0 0.0
    %128 = vmatprep.subr.mxu0 0.0
    %129 = vmatpush1.msra.mxu0 0.0
    %130 = vmatprep.subr.mxu0 0.0
    %131 = vmatpush1.msra.mxu0 0.0
    %132 = vmatprep.subr.mxu0 0.0
    %133 = vmatpush1.msra.mxu0 0.0
    %134 = vmatprep.subr.mxu0 0.0
    %135 = vmatpush1.msra.mxu0 0.0
    %136 = vmatprep.subr.mxu0 0.0
    %137 = vmatpush1.msra.mxu0 0.0
    %138 = vmatprep.subr.mxu0 0.0
    %139 = vmatpush1.msra.mxu0 0.0
    %140 = vmatprep.subr.mxu0 0.0
    %141 = vmatpush1.msra.mxu0 0.0
    %142 = vmatprep.subr.mxu0 0.0
    %143 = vmatpush1.msra.mxu0 0.0
    %144 = vmatprep.subr.mxu0 0.0
    %145 = vmatpush1.msra.mxu0 0.0
    %146 = vmatprep.subr.mxu0 0.0
    %147 = vmatpush1.msra.mxu0 0.0
    %148 = vmatprep.subr.mxu0 0.0
    %149 = vmatpush1.msra.mxu0 0.0
    %150 = vmatprep.subr.mxu0 0.0
    %151 = vmatpush1.msra.mxu0 0.0
    %152 = vmatprep.subr.mxu0 0.0
    %153 = vmatpush1.msra.mxu0 0.0
    %154 = vmatprep.mubr.f32.mxu0 0.0
    %155 = vmatmul.mubr.f32.gmra.mrb[0].mxu0 %v88
    %v156 = vpop.f32.mrb[0].mxu0
    %v157 = vadd.f32 0.0, %v156
    %v158 = vpop.f32.mrb[0].mxu0
    %159 = vdwg.mxu0
    %vm160 = vcmask 64512
    %v162 = vsel %vm160, %v55, 0
    %164 = vmatprep.subr.mxu0 0.0
    %165 = vmatpush1.msra.mxu0 %v83
    %166 = vmatprep.subr.mxu0 0.0
    %167 = vmatpush1.msra.mxu0 0.0
    %168 = vmatprep.subr.mxu0 0.0
    %169 = vmatpush1.msra.mxu0 0.0
    %170 = vmatprep.subr.mxu0 0.0
    %171 = vmatpush1.msra.mxu0 0.0
    %172 = vmatprep.subr.mxu0 0.0
    %173 = vmatpush1.msra.mxu0 0.0
    %174 = vmatprep.subr.mxu0 0.0
    %175 = vmatpush1.msra.mxu0 0.0
    %176 = vmatprep.subr.mxu0 0.0
    %177 = vmatpush1.msra.mxu0 0.0
    %178 = vmatprep.subr.mxu0 0.0
    %179 = vmatpush1.msra.mxu0 0.0
    %180 = vmatprep.subr.mxu0 0.0
    %181 = vmatpush1.msra.mxu0 0.0
    %182 = vmatprep.subr.mxu0 0.0
    %183 = vmatpush1.msra.mxu0 0.0
    %184 = vmatprep.subr.mxu0 0.0
    %185 = vmatpush1.msra.mxu0 0.0
    %186 = vmatprep.subr.mxu0 0.0
    %187 = vmatpush1.msra.mxu0 0.0
    %188 = vmatprep.subr.mxu0 0.0
    %189 = vmatpush1.msra.mxu0 0.0
    %190 = vmatprep.subr.mxu0 0.0
    %191 = vmatpush1.msra.mxu0 0.0
    %192 = vmatprep.subr.mxu0 0.0
    %193 = vmatpush1.msra.mxu0 0.0
    %194 = vmatprep.subr.mxu0 0.0
    %195 = vmatpush1.msra.mxu0 0.0
    %196 = vmatprep.subr.mxu0 0.0
    %197 = vmatpush1.msra.mxu0 0.0
    %198 = vmatprep.subr.mxu0 0.0
    %199 = vmatpush1.msra.mxu0 0.0
    %200 = vmatprep.subr.mxu0 0.0
    %201 = vmatpush1.msra.mxu0 0.0
    %202 = vmatprep.subr.mxu0 0.0
    %203 = vmatpush1.msra.mxu0 0.0
    %204 = vmatprep.subr.mxu0 0.0
    %205 = vmatpush1.msra.mxu0 0.0
    %206 = vmatprep.subr.mxu0 0.0
    %207 = vmatpush1.msra.mxu0 0.0
    %208 = vmatprep.subr.mxu0 0.0
    %209 = vmatpush1.msra.mxu0 0.0
    %210 = vmatprep.subr.mxu0 0.0
    %211 = vmatpush1.msra.mxu0 0.0
    %212 = vmatprep.subr.mxu0 0.0
    %213 = vmatpush1.msra.mxu0 0.0
    %214 = vmatprep.subr.mxu0 0.0
    %215 = vmatpush1.msra.mxu0 0.0
    %216 = vmatprep.subr.mxu0 0.0
    %217 = vmatpush1.msra.mxu0 0.0
    %218 = vmatprep.subr.mxu0 0.0
    %219 = vmatpush1.msra.mxu0 0.0
    %220 = vmatprep.subr.mxu0 0.0
    %221 = vmatpush1.msra.mxu0 0.0
    %222 = vmatprep.subr.mxu0 0.0
    %223 = vmatpush1.msra.mxu0 0.0
    %224 = vmatprep.subr.mxu0 0.0
    %225 = vmatpush1.msra.mxu0 0.0
    %226 = vmatprep.subr.mxu0 0.0
    %227 = vmatpush1.msra.mxu0 0.0
    %228 = vmatprep.mubr.f32.mxu0 0.0
    %229 = vmatmul.mubr.f32.gmra.mrb[0].mxu0 %v162
    %v230 = vpop.f32.mrb[0].mxu0
    %v231 = vadd.f32 %v157, %v230
    %v232 = vpop.f32.mrb[0].mxu0
    %233 = vdwg.mxu0
    %v234 = vld [vmem:[#allocation2 + $0x20] sm:$0xff]
    %v235 = vld [vmem:[#allocation2 + $0x28] sm:$0xff]
    %v236 = vld [vmem:[#allocation2 + $0x30] sm:$0xff]
    %v237 = vld [vmem:[#allocation2 + $0x38] sm:$0xff]
    %v238 = vld [vmem:[#allocation2 + $0x40] sm:$0xff]
    %v239 = vld [vmem:[#allocation2 + $0x48] sm:$0xff]
    %v240 = vld [vmem:[#allocation2 + $0x50] sm:$0xff]
    %v241 = vld [vmem:[#allocation2 + $0x58] sm:$0xff]
    %v242 = vld [vmem:[#allocation2 + $0x60] sm:$0xff]
    %v243 = vld [vmem:[#allocation2 + $0x68] sm:$0xff]
    %v244 = vld [vmem:[#allocation2 + $0x70] sm:$0xff]
    %v245 = vld [vmem:[#allocation2 + $0x78] sm:$0xff]
    %v246 = vld [vmem:[#allocation2 + $0x80] sm:$0xff]
    %v247 = vld [vmem:[#allocation2 + $0x88] sm:$0xff]
    %v248 = vld [vmem:[#allocation2 + $0x90] sm:$0xff]
    %v249 = vld [vmem:[#allocation2 + $0x98] sm:$0xff]
    %250 = vmatprep.subr.mxu0 0.0
    %251 = vmatpush1.msra.mxu0 %v234
    %252 = vmatprep.subr.mxu0 0.0
    %253 = vmatpush1.msra.mxu0 %v235
    %254 = vmatprep.subr.mxu0 0.0
    %255 = vmatpush1.msra.mxu0 %v236
    %256 = vmatprep.subr.mxu0 0.0
    %257 = vmatpush1.msra.mxu0 %v237
    %258 = vmatprep.subr.mxu0 0.0
    %259 = vmatpush1.msra.mxu0 %v238
    %260 = vmatprep.subr.mxu0 0.0
    %261 = vmatpush1.msra.mxu0 %v239
    %262 = vmatprep.subr.mxu0 0.0
    %263 = vmatpush1.msra.mxu0 %v240
    %264 = vmatprep.subr.mxu0 0.0
    %265 = vmatpush1.msra.mxu0 %v241
    %266 = vmatprep.subr.mxu0 0.0
    %267 = vmatpush1.msra.mxu0 %v242
    %268 = vmatprep.subr.mxu0 0.0
    %269 = vmatpush1.msra.mxu0 %v243
    %270 = vmatprep.subr.mxu0 0.0
    %271 = vmatpush1.msra.mxu0 %v244
    %272 = vmatprep.subr.mxu0 0.0
    %273 = vmatpush1.msra.mxu0 %v245
    %274 = vmatprep.subr.mxu0 0.0
    %275 = vmatpush1.msra.mxu0 %v246
    %276 = vmatprep.subr.mxu0 0.0
    %277 = vmatpush1.msra.mxu0 %v247
    %278 = vmatprep.subr.mxu0 0.0
    %279 = vmatpush1.msra.mxu0 %v248
    %280 = vmatprep.subr.mxu0 0.0
    %281 = vmatpush1.msra.mxu0 %v249
    %282 = vmatprep.subr.mxu0 0.0
    %283 = vmatpush1.msra.mxu0 0.0
    %284 = vmatprep.subr.mxu0 0.0
    %285 = vmatpush1.msra.mxu0 0.0
    %286 = vmatprep.subr.mxu0 0.0
    %287 = vmatpush1.msra.mxu0 0.0
    %288 = vmatprep.subr.mxu0 0.0
    %289 = vmatpush1.msra.mxu0 0.0
    %290 = vmatprep.subr.mxu0 0.0
    %291 = vmatpush1.msra.mxu0 0.0
    %292 = vmatprep.subr.mxu0 0.0
    %293 = vmatpush1.msra.mxu0 0.0
    %294 = vmatprep.subr.mxu0 0.0
    %295 = vmatpush1.msra.mxu0 0.0
    %296 = vmatprep.subr.mxu0 0.0
    %297 = vmatpush1.msra.mxu0 0.0
    %298 = vmatprep.subr.mxu0 0.0
    %299 = vmatpush1.msra.mxu0 0.0
    %300 = vmatprep.subr.mxu0 0.0
    %301 = vmatpush1.msra.mxu0 0.0
    %302 = vmatprep.subr.mxu0 0.0
    %303 = vmatpush1.msra.mxu0 0.0
    %304 = vmatprep.subr.mxu0 0.0
    %305 = vmatpush1.msra.mxu0 0.0
    %306 = vmatprep.subr.mxu0 0.0
    %307 = vmatpush1.msra.mxu0 0.0
    %308 = vmatprep.subr.mxu0 0.0
    %309 = vmatpush1.msra.mxu0 0.0
    %310 = vmatprep.subr.mxu0 0.0
    %311 = vmatpush1.msra.mxu0 0.0
    %312 = vmatprep.subr.mxu0 0.0
    %313 = vmatpush1.msra.mxu0 0.0
    %314 = vmatprep.mubr.f32.mxu0 0.0
    %315 = vmatmul.mubr.f32.gmra.mrb[0].mxu0 %v82
    %v316 = vpop.f32.mrb[0].mxu0
    %v317 = vadd.f32 0.0, %v316
    %v318 = vpop.f32.mrb[0].mxu0
    %319 = vdwg.mxu0
    %v320 = vadd.f32 %v231, %v317
    %vm321 = vcmp.eq.s32.totalorder %v57, 0
    %v322 = vsel %vm321, 1, 0
    %v323 = vcvt.s32.f32 %v322
    %v324 = vld [vmem:[#allocation2 + $0x18] sm:$0x1]
    %326 = vset.pattern.permute.xlu0 0
    %327 = vperm.xlu0 %326, %v323
    %v328 = vpop.permute.xlu0 %327
    %v330 = vlaneseq
    %v331 = vshrl.u32 %v330, 7
    %v332 = vsub.s32 0, %v331
    %v333 = vrot.slane %v324, %v332
    %v334 = vmul.f32 %v328, %v333
    %v335 = vadd.f32 %v320, %v334
    %vm336 = vcmp.eq.s32.totalorder %v57, 1
    %v337 = vsel %vm336, 1, 0
    %v338 = vcvt.s32.f32 %v337
    %v339 = vld [vmem:[#allocation2 + $0x19] sm:$0x1]
    %341 = vset.pattern.permute.xlu0 0
    %342 = vperm.xlu0 %341, %v338
    %v343 = vpop.permute.xlu0 %342
    %v345 = vlaneseq
    %v346 = vshrl.u32 %v345, 7
    %v347 = vsub.s32 0, %v346
    %v348 = vrot.slane %v339, %v347
    %v349 = vmul.f32 %v343, %v348
    %v350 = vadd.f32 %v335, %v349
    %vm351 = vcmp.eq.s32.totalorder %v57, 2
    %v352 = vsel %vm351, 1, 0
    %v353 = vcvt.s32.f32 %v352
    %v354 = vld [vmem:[#allocation2 + $0x1a] sm:$0x1]
    %356 = vset.pattern.permute.xlu0 0
    %357 = vperm.xlu0 %356, %v353
    %v358 = vpop.permute.xlu0 %357
    %v360 = vlaneseq
    %v361 = vshrl.u32 %v360, 7
    %v362 = vsub.s32 0, %v361
    %v363 = vrot.slane %v354, %v362
    %v364 = vmul.f32 %v358, %v363
    %v365 = vadd.f32 %v350, %v364
    %v366 = vld [vmem:[#allocation2 + $0xa0] sm:$0x1]
    %v367 = vlaneseq
    %v368 = vshrl.u32 %v367, 7
    %v369 = vsub.s32 0, %v368
    %v370 = vrot.slane %v366, %v369
    %v371 = vadd.f32 %v365, %v370
    %v372 = vxor.u32 %v371, 2147483648
    %v373 = vmul.f32 %v372, 1.442695
    %v374 = vpow.pop %v373
    %v375 = vadd.f32 %v374, 1.0
    %v376 = vrcp.pop %v375
    %v377 = vmul.f32 1.0, %v376
    %v378 = vmul.f32 %v371, %v377
    %v379 = vld [vmem:[#allocation2 + $0xa8] sm:$0xff]
    %v380 = vld [vmem:[#allocation2 + $0xb0] sm:$0xff]
    %v381 = vld [vmem:[#allocation2 + $0xb8] sm:$0xff]
    %v382 = vld [vmem:[#allocation2 + $0xc0] sm:$0xff]
    %v383 = vld [vmem:[#allocation2 + $0xc8] sm:$0xff]
    %v384 = vld [vmem:[#allocation2 + $0xd0] sm:$0xff]
    %v385 = vld [vmem:[#allocation2 + $0xd8] sm:$0xff]
    %v386 = vld [vmem:[#allocation2 + $0xe0] sm:$0xff]
    %v387 = vld [vmem:[#allocation2 + $0xe8] sm:$0xff]
    %v388 = vld [vmem:[#allocation2 + $0xf0] sm:$0xff]
    %v389 = vld [vmem:[#allocation2 + $0xf8] sm:$0xff]
    %v390 = vld [vmem:[#allocation2 + $0x100] sm:$0xff]
    %v391 = vld [vmem:[#allocation2 + $0x108] sm:$0xff]
    %v392 = vld [vmem:[#allocation2 + $0x110] sm:$0xff]
    %v393 = vld [vmem:[#allocation2 + $0x118] sm:$0xff]
    %v394 = vld [vmem:[#allocation2 + $0x120] sm:$0xff]
    %v395 = vld [vmem:[#allocation2 + $0x128] sm:$0x1]
    %v396 = vlaneseq
    %v397 = vshrl.u32 %v396, 7
    %v398 = vsub.s32 0, %v397
    %v399 = vrot.slane %v395, %v398
    %400 = vmatprep.subr.mxu0 0.0
    %401 = vmatpush1.msra.mxu0 %v379
    %402 = vmatprep.subr.mxu0 0.0
    %403 = vmatpush1.msra.mxu0 %v380
    %404 = vmatprep.subr.mxu0 0.0
    %405 = vmatpush1.msra.mxu0 %v381
    %406 = vmatprep.subr.mxu0 0.0
    %407 = vmatpush1.msra.mxu0 %v382
    %408 = vmatprep.subr.mxu0 0.0
    %409 = vmatpush1.msra.mxu0 %v383
    %410 = vmatprep.subr.mxu0 0.0
    %411 = vmatpush1.msra.mxu0 %v384
    %412 = vmatprep.subr.mxu0 0.0
    %413 = vmatpush1.msra.mxu0 %v385
    %414 = vmatprep.subr.mxu0 0.0
    %415 = vmatpush1.msra.mxu0 %v386
    %416 = vmatprep.subr.mxu0 0.0
    %417 = vmatpush1.msra.mxu0 %v387
    %418 = vmatprep.subr.mxu0 0.0
    %419 = vmatpush1.msra.mxu0 %v388
    %420 = vmatprep.subr.mxu0 0.0
    %421 = vmatpush1.msra.mxu0 %v389
    %422 = vmatprep.subr.mxu0 0.0
    %423 = vmatpush1.msra.mxu0 %v390
    %424 = vmatprep.subr.mxu0 0.0
    %425 = vmatpush1.msra.mxu0 %v391
    %426 = vmatprep.subr.mxu0 0.0
    %427 = vmatpush1.msra.mxu0 %v392
    %428 = vmatprep.subr.mxu0 0.0
    %429 = vmatpush1.msra.mxu0 %v393
    %430 = vmatprep.subr.mxu0 0.0
    %431 = vmatpush1.msra.mxu0 %v394
    %432 = vmatprep.subr.mxu0 0.0
    %433 = vmatpush1.msra.mxu0 0.0
    %434 = vmatprep.subr.mxu0 0.0
    %435 = vmatpush1.msra.mxu0 0.0
    %436 = vmatprep.subr.mxu0 0.0
    %437 = vmatpush1.msra.mxu0 0.0
    %438 = vmatprep.subr.mxu0 0.0
    %439 = vmatpush1.msra.mxu0 0.0
    %440 = vmatprep.subr.mxu0 0.0
    %441 = vmatpush1.msra.mxu0 0.0
    %442 = vmatprep.subr.mxu0 0.0
    %443 = vmatpush1.msra.mxu0 0.0
    %444 = vmatprep.subr.mxu0 0.0
    %445 = vmatpush1.msra.mxu0 0.0
    %446 = vmatprep.subr.mxu0 0.0
    %447 = vmatpush1.msra.mxu0 0.0
    %448 = vmatprep.subr.mxu0 0.0
    %449 = vmatpush1.msra.mxu0 0.0
    %450 = vmatprep.subr.mxu0 0.0
    %451 = vmatpush1.msra.mxu0 0.0
    %452 = vmatprep.subr.mxu0 0.0
    %453 = vmatpush1.msra.mxu0 0.0
    %454 = vmatprep.subr.mxu0 0.0
    %455 = vmatpush1.msra.mxu0 0.0
    %456 = vmatprep.subr.mxu0 0.0
    %457 = vmatpush1.msra.mxu0 0.0
    %458 = vmatprep.subr.mxu0 0.0
    %459 = vmatpush1.msra.mxu0 0.0
    %460 = vmatprep.subr.mxu0 0.0
    %461 = vmatpush1.msra.mxu0 0.0
    %462 = vmatprep.subr.mxu0 0.0
    %463 = vmatpush1.msra.mxu0 0.0
    %464 = vmatprep.mubr.f32.mxu0 0.0
    %465 = vmatmul.mubr.f32.gmra.mrb[0].mxu0 %v378
    %v466 = vpop.f32.mrb[0].mxu0
    %v467 = vadd.f32 %v399, %v466
    %v468 = vpop.f32.mrb[0].mxu0
    %469 = vdwg.mxu0
    %v470 = vxor.u32 %v467, 2147483648
    %v471 = vmul.f32 %v470, 1.442695
    %v472 = vpow.pop %v471
    %v473 = vadd.f32 %v472, 1.0
    %v474 = vrcp.pop %v473
    %v475 = vmul.f32 1.0, %v474
    %v476 = vmul.f32 %v467, %v475
    %v477 = vld [vmem:[#allocation5] sm:$0xff]
    %v478 = vld [vmem:[#allocation5 + $0x8] sm:$0xff]
    %v479 = vld [vmem:[#allocation5 + $0x10] sm:$0xff]
    %v480 = vld [vmem:[#allocation5 + $0x18] sm:$0xff]
    %v481 = vld [vmem:[#allocation5 + $0x20] sm:$0xff]
    %v482 = vld [vmem:[#allocation5 + $0x28] sm:$0xff]
    %v483 = vld [vmem:[#allocation5 + $0x30] sm:$0xff]
    %v484 = vld [vmem:[#allocation5 + $0x38] sm:$0xff]
    %v485 = vld [vmem:[#allocation5 + $0x40] sm:$0xff]
    %v486 = vld [vmem:[#allocation5 + $0x48] sm:$0xff]
    %v487 = vld [vmem:[#allocation5 + $0x50] sm:$0xff]
    %v488 = vld [vmem:[#allocation5 + $0x58] sm:$0xff]
    %v489 = vld [vmem:[#allocation5 + $0x60] sm:$0xff]
    %v490 = vld [vmem:[#allocation5 + $0x68] sm:$0xff]
    %v491 = vld [vmem:[#allocation5 + $0x70] sm:$0xff]
    %v492 = vld [vmem:[#allocation5 + $0x78] sm:$0xff]
    %v493 = vld [vmem:[#allocation5 + $0x80] sm:$0x1]
    %v494 = vlaneseq
    %v495 = vshrl.u32 %v494, 7
    %v496 = vsub.s32 0, %v495
    %v497 = vrot.slane %v493, %v496
    %498 = vmatprep.subr.mxu0 0.0
    %499 = vmatpush1.msra.mxu0 %v477
    %500 = vmatprep.subr.mxu0 0.0
    %501 = vmatpush1.msra.mxu0 %v478
    %502 = vmatprep.subr.mxu0 0.0
    %503 = vmatpush1.msra.mxu0 %v479
    %504 = vmatprep.subr.mxu0 0.0
    %505 = vmatpush1.msra.mxu0 %v480
    %506 = vmatprep.subr.mxu0 0.0
    %507 = vmatpush1.msra.mxu0 %v481
    %508 = vmatprep.subr.mxu0 0.0
    %509 = vmatpush1.msra.mxu0 %v482
    %510 = vmatprep.subr.mxu0 0.0
    %511 = vmatpush1.msra.mxu0 %v483
    %512 = vmatprep.subr.mxu0 0.0
    %513 = vmatpush1.msra.mxu0 %v484
    %514 = vmatprep.subr.mxu0 0.0
    %515 = vmatpush1.msra.mxu0 %v485
    %516 = vmatprep.subr.mxu0 0.0
    %517 = vmatpush1.msra.mxu0 %v486
    %518 = vmatprep.subr.mxu0 0.0
    %519 = vmatpush1.msra.mxu0 %v487
    %520 = vmatprep.subr.mxu0 0.0
    %521 = vmatpush1.msra.mxu0 %v488
    %522 = vmatprep.subr.mxu0 0.0
    %523 = vmatpush1.msra.mxu0 %v489
    %524 = vmatprep.subr.mxu0 0.0
    %525 = vmatpush1.msra.mxu0 %v490
    %526 = vmatprep.subr.mxu0 0.0
    %527 = vmatpush1.msra.mxu0 %v491
    %528 = vmatprep.subr.mxu0 0.0
    %529 = vmatpush1.msra.mxu0 %v492
    %530 = vmatprep.subr.mxu0 0.0
    %531 = vmatpush1.msra.mxu0 0.0
    %532 = vmatprep.subr.mxu0 0.0
    %533 = vmatpush1.msra.mxu0 0.0
    %534 = vmatprep.subr.mxu0 0.0
    %535 = vmatpush1.msra.mxu0 0.0
    %536 = vmatprep.subr.mxu0 0.0
    %537 = vmatpush1.msra.mxu0 0.0
    %538 = vmatprep.subr.mxu0 0.0
    %539 = vmatpush1.msra.mxu0 0.0
    %540 = vmatprep.subr.mxu0 0.0
    %541 = vmatpush1.msra.mxu0 0.0
    %542 = vmatprep.subr.mxu0 0.0
    %543 = vmatpush1.msra.mxu0 0.0
    %544 = vmatprep.subr.mxu0 0.0
    %545 = vmatpush1.msra.mxu0 0.0
    %546 = vmatprep.subr.mxu0 0.0
    %547 = vmatpush1.msra.mxu0 0.0
    %548 = vmatprep.subr.mxu0 0.0
    %549 = vmatpush1.msra.mxu0 0.0
    %550 = vmatprep.subr.mxu0 0.0
    %551 = vmatpush1.msra.mxu0 0.0
    %552 = vmatprep.subr.mxu0 0.0
    %553 = vmatpush1.msra.mxu0 0.0
    %554 = vmatprep.subr.mxu0 0.0
    %555 = vmatpush1.msra.mxu0 0.0
    %556 = vmatprep.subr.mxu0 0.0
    %557 = vmatpush1.msra.mxu0 0.0
    %558 = vmatprep.subr.mxu0 0.0
    %559 = vmatpush1.msra.mxu0 0.0
    %560 = vmatprep.subr.mxu0 0.0
    %561 = vmatpush1.msra.mxu0 0.0
    %562 = vmatprep.mubr.f32.mxu0 0.0
    %563 = vmatmul.mubr.f32.gmra.mrb[0].mxu0 %v476
    %v564 = vpop.f32.mrb[0].mxu0
    %v565 = vadd.f32 %v497, %v564
    %v566 = vpop.f32.mrb[0].mxu0
    %567 = vdwg.mxu0
    %568 = vst [vmem:[#allocation7] sm:$0xff] %v565
    // Predicated region
    $region38: #{tpu_custom_call.1} parent=1 // pred_check
      _
    $region39: #{tpu_custom_call.1} parent=1 // pred_check_branch
      %570 = sbr.rel (0) target = $region41
    $region40: #{tpu_custom_call.1} parent=1 // pred_region
      %s572 = ssub.s32 128, 128
      %573 = vsyncadd [#allocation4], %s572
      %s575 = sshll.u32 [#allocation7], 4
      %s576 = int_to_ptr.vmem [resolvable:$true] %s575
      %578 = dma.vmem_to_hbm [thread:$0]  %s576, 128, %s7, [#allocation4]
    $region41: #{tpu_custom_call.1} parent=1 // pred_fallthru
      _
    // Predicated region
    $region42: #{tpu_custom_call.1} parent=1 // pred_check
      _
    $region43: #{tpu_custom_call.1} parent=1 // pred_check_branch
      %580 = sbr.rel (0) target = $region45
    $region44: #{tpu_custom_call.1} parent=1 // pred_region
      %581 = dma.done [#allocation4], 128
    $region45: #{tpu_custom_call.1} parent=1 // pred_fallthru
      _
    %582 = vsyncpa [#allocation3], 1
    %583 = vsyncpa [#allocation6], 1
    %584 = vsyncpa [#allocation4], 1

</llo_original>
